<compile_context>
chip_gen: v6e
topology: v6e:2x2x1
jax: 0.10.0
libtpu: 0.0.40
codegen_flags: <defaults>
</compile_context>

<pallas_src>
import jax
import jax.numpy as jnp
from jax.experimental import pallas as pl
from jax.experimental.pallas import tpu as pltpu


def _round_up(n, m):
    return ((n + m - 1) // m) * m


def dqn_kernel(x_ref,
               w1_ref, b1_ref,
               w2_ref, b2_ref,
               w3_ref, b3_ref,
               w4_ref, b4_ref,
               out_ref):
    """One batch tile: 4 MXU matmuls (bf16 x bf16 -> f32 acc), f32 bias+ReLU epilogues,
    narrow [tile, action_size] f32 store."""

    def chain(h):
        # h: f32 [rows, state]; cast to bf16 in-kernel (wrapper passes raw f32 x).
        h = h.astype(jnp.bfloat16)
        h = jnp.maximum(
            jnp.dot(h, w1_ref[...], preferred_element_type=jnp.float32) + b1_ref[...], 0.0)
        h = jnp.maximum(
            jnp.dot(h.astype(jnp.bfloat16), w2_ref[...],
                    preferred_element_type=jnp.float32) + b2_ref[...], 0.0)
        h = jnp.maximum(
            jnp.dot(h.astype(jnp.bfloat16), w3_ref[...],
                    preferred_element_type=jnp.float32) + b3_ref[...], 0.0)
        return (jnp.dot(h.astype(jnp.bfloat16), w4_ref[...],
                        preferred_element_type=jnp.float32) + b4_ref[...])

    tb = x_ref.shape[0]
    if tb >= 256:
        # Two independent dependency chains -> scheduler overlaps layer-l matmul of one
        # stream with the epilogue / MRF drain of the other (v5e/v6e latency hiding).
        half = tb // 2
        out_ref[0:half, :] = chain(x_ref[0:half, :])
        out_ref[half:tb, :] = chain(x_ref[half:tb, :])
    else:
        out_ref[...] = chain(x_ref[...])


def dqn_forward(x, prepped_params, *, max_block_b=1024):
    """x: [B, state_size] f32. prepped_params: bf16 weights [in, out], f32 biases [1, out]
    at logical (unpadded) sizes. Returns Q-values [B, action_size] f32."""
    (w1, b1), (w2, b2), (w3, b3), (w4, b4) = prepped_params
    B, s = x.shape
    assert s == w1.shape[0], "state_size mismatch"
    n_out = w4.shape[1]

    # Adaptive batch tiling: single tile for small batches (grid=1, no per-step overhead),
    # max_block_b-row tiles for large batches. Tile rows must be a multiple of 8 (sublane).
    assert max_block_b % 8 == 0
    B_pad = _round_up(max(B, 1), 8)
    if B_pad <= max_block_b:
        block_b = B_pad
    else:
        block_b = max_block_b
        B_pad = _round_up(B, block_b)

    xp = x if B_pad == B else jnp.pad(x, ((0, B_pad - B), (0, 0)))

    grid = (B_pad // block_b,)
    xmap = lambda i: (i, 0)      # stream batch tiles
    cmap = lambda i: (0, 0)      # weights/biases resident in VMEM across all grid steps

    flops = 2 * B_pad * sum(w.shape[0] * w.shape[1] for w, _ in prepped_params)
    bytes_accessed = (
        xp.size * xp.dtype.itemsize
        + B_pad * n_out * 4
        + sum(w.size * w.dtype.itemsize + b.size * b.dtype.itemsize
              for w, b in prepped_params))

    out = pl.pallas_call(
        dqn_kernel,
        out_shape=jax.ShapeDtypeStruct((B_pad, n_out), jnp.float32),
        grid=grid,
        in_specs=[
            pl.BlockSpec((block_b, s), xmap),
            pl.BlockSpec(w1.shape, cmap), pl.BlockSpec(b1.shape, cmap),
            pl.BlockSpec(w2.shape, cmap), pl.BlockSpec(b2.shape, cmap),
            pl.BlockSpec(w3.shape, cmap), pl.BlockSpec(b3.shape, cmap),
            pl.BlockSpec(w4.shape, cmap), pl.BlockSpec(b4.shape, cmap),
        ],
        out_specs=pl.BlockSpec((block_b, n_out), xmap),
        compiler_params=pltpu.CompilerParams(
            # Batch axis is independent -> shardable across v7x's 2 TensorCores.
            dimension_semantics=("parallel",),
            # Real footprint ~2-3 MiB; 8 MiB leaves headroom on v7x (64 MiB physical).
            vmem_limit_bytes=8 * 1024 * 1024),
        cost_estimate=pl.CostEstimate(
            flops=flops, transcendentals=0, bytes_accessed=bytes_accessed),
    )(xp, w1, b1, w2, b2, w3, b3, w4, b4)

    return out if B_pad == B else out[:B]


def init_params(key, state_size, action_size, hidden_sizes):
    """Deterministic synthetic init (uniform, PyTorch-Linear-like fan_in scaling),
    stored as [in, out] (transposed vs. PyTorch's [out, in]) so the kernel does x @ W."""
    sizes = [state_size] + list(hidden_sizes) + [action_size]
    params = []
    for i in range(len(sizes) - 1):
        fan_in, fan_out = sizes[i], sizes[i + 1]
        key, kw, kb = jax.random.split(key, 3)
        bound = 1.0 / jnp.sqrt(jnp.float32(fan_in))
        w = jax.random.uniform(kw, (fan_in, fan_out), jnp.float32, -bound, bound)
        b = jax.random.uniform(kb, (1, fan_out), jnp.float32, -bound, bound)
        params.append((w, b))
    return params


def prepare_params(params):
    """Cast weights to bf16 (f32 biases), keep logical (unpadded) shapes."""
    return [(w.astype(jnp.bfloat16), b.astype(jnp.float32)) for w, b in params]


def reference_forward_f32(x, params):
    """Pure-JAX f32 reference at logical sizes."""
    h = x
    for i, (w, b) in enumerate(params):
        h = h @ w + b
        if i < len(params) - 1:
            h = jnp.maximum(h, 0.0)
    return h


def reference_forward_mirrored(x, prepped_params):
    """Pure-JAX reference mirroring the kernel's bf16 dataflow exactly."""
    h = x.astype(jnp.bfloat16)
    for i, (w, b) in enumerate(prepped_params):
        h = jnp.dot(h, w, preferred_element_type=jnp.float32) + b
        if i < len(prepped_params) - 1:
            h = jnp.maximum(h, 0.0).astype(jnp.bfloat16)
    return h


if __name__ == "__main__":
    state_size = 16
    action_size = 4
    hidden_sizes = [256, 128, 64]   # module defaults

    key = jax.random.PRNGKey(0)
    key, kx = jax.random.split(key)
    params = init_params(key, state_size, action_size, hidden_sizes)
    prepped = prepare_params(params)

    # Small RL batch: single tile, grid=1, no batch padding / wrapper ops.
    batch = 32
    x = jax.random.normal(kx, (batch, state_size), jnp.float32)
    out = jax.block_until_ready(dqn_forward(x, prepped))
    assert out.shape == (batch, action_size)

    ref_mirror = reference_forward_mirrored(x, prepped)
    assert jnp.allclose(out, ref_mirror, atol=2e-3, rtol=2e-3), \
        "Pallas output mismatch vs bf16-mirrored reference (small batch)"
    ref_f32 = reference_forward_f32(x, params)
    assert jnp.allclose(out, ref_f32, atol=5e-2, rtol=5e-2), \
        "Pallas output mismatch vs f32 reference (small batch)"

    # Larger batch: exercises the multi-tile grid and the two-stream interleaved path.
    key, kx2 = jax.random.split(key)
    batch2 = 512
    x2 = jax.random.normal(kx2, (batch2, state_size), jnp.float32)
    out2 = jax.block_until_ready(dqn_forward(x2, prepped, max_block_b=256))
    assert out2.shape == (batch2, action_size)
    assert jnp.allclose(out2, reference_forward_mirrored(x2, prepped),
                        atol=2e-3, rtol=2e-3), \
        "Pallas output mismatch vs bf16-mirrored reference (tiled batch)"

    print("KERNEL_OK")
</pallas_src>

<mosaic_0001>
module attributes {stable_mosaic.version = 11 : i64} {
  func.func @dqn_kernel(%arg0: i32, %arg1: memref<32x16xf32, #tpu.memory_space<vmem>>, %arg2: memref<16x256xbf16, #tpu.memory_space<vmem>>, %arg3: memref<1x256xf32, #tpu.memory_space<vmem>>, %arg4: memref<256x128xbf16, #tpu.memory_space<vmem>>, %arg5: memref<1x128xf32, #tpu.memory_space<vmem>>, %arg6: memref<128x64xbf16, #tpu.memory_space<vmem>>, %arg7: memref<1x64xf32, #tpu.memory_space<vmem>>, %arg8: memref<64x4xbf16, #tpu.memory_space<vmem>>, %arg9: memref<1x4xf32, #tpu.memory_space<vmem>>, %arg10: memref<32x4xf32, #tpu.memory_space<vmem>>) attributes {dimension_semantics = [#tpu.dimension_semantics<parallel>], iteration_bounds = array<i64: 1>, scalar_prefetch = 0 : i64, scratch_operands = 0 : i64, tpu.core_type = #tpu.core_type<tc>, window_params = [{transform_indices = @transform_0, window_bounds = array<i64: 32, 16>}, {pipeline_mode = #tpu.pipeline_mode<synchronous>, transform_indices = @transform_1, window_bounds = array<i64: 16, 256>}, {pipeline_mode = #tpu.pipeline_mode<synchronous>, transform_indices = @transform_2, window_bounds = array<i64: 1, 256>}, {pipeline_mode = #tpu.pipeline_mode<synchronous>, transform_indices = @transform_3, window_bounds = array<i64: 256, 128>}, {pipeline_mode = #tpu.pipeline_mode<synchronous>, transform_indices = @transform_4, window_bounds = array<i64: 1, 128>}, {pipeline_mode = #tpu.pipeline_mode<synchronous>, transform_indices = @transform_5, window_bounds = array<i64: 128, 64>}, {pipeline_mode = #tpu.pipeline_mode<synchronous>, transform_indices = @transform_6, window_bounds = array<i64: 1, 64>}, {pipeline_mode = #tpu.pipeline_mode<synchronous>, transform_indices = @transform_7, window_bounds = array<i64: 64, 4>}, {pipeline_mode = #tpu.pipeline_mode<synchronous>, transform_indices = @transform_8, window_bounds = array<i64: 1, 4>}, {transform_indices = @transform_9, window_bounds = array<i64: 32, 4>}]} {
    %c0 = arith.constant 0 : index
    %c0_0 = arith.constant 0 : index
    %0 = vector.load %arg1[%c0, %c0_0] : memref<32x16xf32, #tpu.memory_space<vmem>>, vector<32x16xf32>
    %1 = arith.truncf %0 : vector<32x16xf32> to vector<32x16xbf16>
    %c0_1 = arith.constant 0 : index
    %c0_2 = arith.constant 0 : index
    %2 = vector.load %arg2[%c0_1, %c0_2] : memref<16x256xbf16, #tpu.memory_space<vmem>>, vector<16x256xbf16>
    %cst = arith.constant dense<0.000000e+00> : vector<32x256xf32>
    %3 = tpu.matmul %1, %2, %cst {dimension_numbers = #tpu.dot_dimension_numbers<[1], [0], [0], [1], [0, 0, 1, 1], [], []>} : vector<32x16xbf16>, vector<16x256xbf16>, vector<32x256xf32> -> vector<32x256xf32>
    %c0_3 = arith.constant 0 : index
    %c0_4 = arith.constant 0 : index
    %4 = vector.load %arg3[%c0_3, %c0_4] : memref<1x256xf32, #tpu.memory_space<vmem>>, vector<1x256xf32>
    %5 = vector.broadcast %4 : vector<1x256xf32> to vector<32x256xf32>
    %6 = arith.addf %3, %5 : vector<32x256xf32>
    %cst_5 = arith.constant 0.000000e+00 : f32
    %7 = vector.broadcast %cst_5 : f32 to vector<32x256xf32>
    %8 = arith.maximumf %6, %7 : vector<32x256xf32>
    %9 = arith.truncf %8 : vector<32x256xf32> to vector<32x256xbf16>
    %c0_6 = arith.constant 0 : index
    %c0_7 = arith.constant 0 : index
    %10 = vector.load %arg4[%c0_6, %c0_7] : memref<256x128xbf16, #tpu.memory_space<vmem>>, vector<256x128xbf16>
    %cst_8 = arith.constant dense<0.000000e+00> : vector<32x128xf32>
    %11 = tpu.matmul %9, %10, %cst_8 {dimension_numbers = #tpu.dot_dimension_numbers<[1], [0], [0], [1], [0, 0, 1, 1], [], []>} : vector<32x256xbf16>, vector<256x128xbf16>, vector<32x128xf32> -> vector<32x128xf32>
    %c0_9 = arith.constant 0 : index
    %c0_10 = arith.constant 0 : index
    %12 = vector.load %arg5[%c0_9, %c0_10] : memref<1x128xf32, #tpu.memory_space<vmem>>, vector<1x128xf32>
    %13 = vector.broadcast %12 : vector<1x128xf32> to vector<32x128xf32>
    %14 = arith.addf %11, %13 : vector<32x128xf32>
    %cst_11 = arith.constant 0.000000e+00 : f32
    %15 = vector.broadcast %cst_11 : f32 to vector<32x128xf32>
    %16 = arith.maximumf %14, %15 : vector<32x128xf32>
    %17 = arith.truncf %16 : vector<32x128xf32> to vector<32x128xbf16>
    %c0_12 = arith.constant 0 : index
    %c0_13 = arith.constant 0 : index
    %18 = vector.load %arg6[%c0_12, %c0_13] : memref<128x64xbf16, #tpu.memory_space<vmem>>, vector<128x64xbf16>
    %cst_14 = arith.constant dense<0.000000e+00> : vector<32x64xf32>
    %19 = tpu.matmul %17, %18, %cst_14 {dimension_numbers = #tpu.dot_dimension_numbers<[1], [0], [0], [1], [0, 0, 1, 1], [], []>} : vector<32x128xbf16>, vector<128x64xbf16>, vector<32x64xf32> -> vector<32x64xf32>
    %c0_15 = arith.constant 0 : index
    %c0_16 = arith.constant 0 : index
    %20 = vector.load %arg7[%c0_15, %c0_16] : memref<1x64xf32, #tpu.memory_space<vmem>>, vector<1x64xf32>
    %21 = vector.broadcast %20 : vector<1x64xf32> to vector<32x64xf32>
    %22 = arith.addf %19, %21 : vector<32x64xf32>
    %cst_17 = arith.constant 0.000000e+00 : f32
    %23 = vector.broadcast %cst_17 : f32 to vector<32x64xf32>
    %24 = arith.maximumf %22, %23 : vector<32x64xf32>
    %25 = arith.truncf %24 : vector<32x64xf32> to vector<32x64xbf16>
    %c0_18 = arith.constant 0 : index
    %c0_19 = arith.constant 0 : index
    %26 = vector.load %arg8[%c0_18, %c0_19] : memref<64x4xbf16, #tpu.memory_space<vmem>>, vector<64x4xbf16>
    %cst_20 = arith.constant dense<0.000000e+00> : vector<32x4xf32>
    %27 = tpu.matmul %25, %26, %cst_20 {dimension_numbers = #tpu.dot_dimension_numbers<[1], [0], [0], [1], [0, 0, 1, 1], [], []>} : vector<32x64xbf16>, vector<64x4xbf16>, vector<32x4xf32> -> vector<32x4xf32>
    %c0_21 = arith.constant 0 : index
    %c0_22 = arith.constant 0 : index
    %28 = vector.load %arg9[%c0_21, %c0_22] : memref<1x4xf32, #tpu.memory_space<vmem>>, vector<1x4xf32>
    %29 = vector.broadcast %28 : vector<1x4xf32> to vector<32x4xf32>
    %30 = arith.addf %27, %29 : vector<32x4xf32>
    %c0_23 = arith.constant 0 : index
    %c0_24 = arith.constant 0 : index
    %31 = vector.load %arg10[%c0_23, %c0_24] : memref<32x4xf32, #tpu.memory_space<vmem>>, vector<32x4xf32>
    tpu.vector_store %arg10[%c0_23, %c0_24], %30 {strides = array<i32>} : memref<32x4xf32, #tpu.memory_space<vmem>>, vector<32x4xf32>,
    return
  }
  func.func @transform_0(%arg0: i32) -> (i32, i32) {
    %c0_i32 = arith.constant 0 : i32
    %c0_i32_0 = arith.constant 0 : i32
    return %arg0, %c0_i32 : i32, i32
  }
  func.func @transform_1(%arg0: i32) -> (i32, i32) {
    %c0_i32 = arith.constant 0 : i32
    %c0_i32_0 = arith.constant 0 : i32
    %c0_i32_1 = arith.constant 0 : i32
    return %c0_i32, %c0_i32_0 : i32, i32
  }
  func.func @transform_2(%arg0: i32) -> (i32, i32) {
    %c0_i32 = arith.constant 0 : i32
    %c0_i32_0 = arith.constant 0 : i32
    %c0_i32_1 = arith.constant 0 : i32
    return %c0_i32, %c0_i32_0 : i32, i32
  }
  func.func @transform_3(%arg0: i32) -> (i32, i32) {
    %c0_i32 = arith.constant 0 : i32
    %c0_i32_0 = arith.constant 0 : i32
    %c0_i32_1 = arith.constant 0 : i32
    return %c0_i32, %c0_i32_0 : i32, i32
  }
  func.func @transform_4(%arg0: i32) -> (i32, i32) {
    %c0_i32 = arith.constant 0 : i32
    %c0_i32_0 = arith.constant 0 : i32
    %c0_i32_1 = arith.constant 0 : i32
    return %c0_i32, %c0_i32_0 : i32, i32
  }
  func.func @transform_5(%arg0: i32) -> (i32, i32) {
    %c0_i32 = arith.constant 0 : i32
    %c0_i32_0 = arith.constant 0 : i32
    %c0_i32_1 = arith.constant 0 : i32
    return %c0_i32, %c0_i32_0 : i32, i32
  }
  func.func @transform_6(%arg0: i32) -> (i32, i32) {
    %c0_i32 = arith.constant 0 : i32
    %c0_i32_0 = arith.constant 0 : i32
    %c0_i32_1 = arith.constant 0 : i32
    return %c0_i32, %c0_i32_0 : i32, i32
  }
  func.func @transform_7(%arg0: i32) -> (i32, i32) {
    %c0_i32 = arith.constant 0 : i32
    %c0_i32_0 = arith.constant 0 : i32
    %c0_i32_1 = arith.constant 0 : i32
    return %c0_i32, %c0_i32_0 : i32, i32
  }
  func.func @transform_8(%arg0: i32) -> (i32, i32) {
    %c0_i32 = arith.constant 0 : i32
    %c0_i32_0 = arith.constant 0 : i32
    %c0_i32_1 = arith.constant 0 : i32
    return %c0_i32, %c0_i32_0 : i32, i32
  }
  func.func @transform_9(%arg0: i32) -> (i32, i32) {
    %c0_i32 = arith.constant 0 : i32
    %c0_i32_0 = arith.constant 0 : i32
    return %arg0, %c0_i32 : i32, i32
  }
}

</mosaic_0001>

<llo_original>
// kernel: tpu_custom_call.1
$region0: #{tpu_custom_call.1}
  #allocation0 [shape = 'u32[]', space=smem, size = 0x4, offset = 0x4, fixed_abs, tag = 'smem constant byte address 0x4 - core index']
  #allocation1 [shape = 'u32[144,128]{1,0:T(1,128)}', space=vmem, size = 0x12000, scoped, tag = 'internal scratch']
  %s0 = inlined_call_operand.vmem [shape: f32[32,16], index: 0, kind: input, shape index: {}]
  %s1 = inlined_call_operand.vmem [shape: bf16[16,256], index: 1, kind: input, shape index: {}]
  %s2 = inlined_call_operand.vmem [shape: f32[1,256], index: 2, kind: input, shape index: {}]
  %s3 = inlined_call_operand.vmem [shape: bf16[256,128], index: 3, kind: input, shape index: {}]
  %s4 = inlined_call_operand.vmem [shape: f32[1,128], index: 4, kind: input, shape index: {}]
  %s5 = inlined_call_operand.vmem [shape: bf16[128,64], index: 5, kind: input, shape index: {}]
  %s6 = inlined_call_operand.vmem [shape: f32[1,64], index: 6, kind: input, shape index: {}]
  %s7 = inlined_call_operand.vmem [shape: bf16[64,4], index: 7, kind: input, shape index: {}]
  %s8 = inlined_call_operand.vmem [shape: f32[1,4], index: 8, kind: input, shape index: {}]
  %s9 = inlined_call_operand.vmem [shape: f32[32,4], index: 9, kind: output, shape index: {}]
  %s10 = sld [smem:[#allocation0]]
  $region46: #{tpu_custom_call.1} parent=0
    _
  %s12 = ssub.s32 1, %s10
  %s13 = scalar_select 0, %s12, %s10
  // Predicated region
  $region2: #{tpu_custom_call.1} parent=0 // pred_check
    _
  $region3: #{tpu_custom_call.1} parent=0 // pred_check_branch
    %15 = sbr.rel (0) target = $region5
  $region4: #{tpu_custom_call.1} parent=0 // pred_region
    _
  $region5: #{tpu_custom_call.1} parent=0 // pred_fallthru
    _
  // Predicated region
  $region6: #{tpu_custom_call.1} parent=0 // pred_check
    _
  $region7: #{tpu_custom_call.1} parent=0 // pred_check_branch
    %17 = sbr.rel (0) target = $region9
  $region8: #{tpu_custom_call.1} parent=0 // pred_region
    _
  $region9: #{tpu_custom_call.1} parent=0 // pred_fallthru
    _
  // Predicated region
  $region10: #{tpu_custom_call.1} parent=0 // pred_check
    _
  $region11: #{tpu_custom_call.1} parent=0 // pred_check_branch
    %19 = sbr.rel (0) target = $region13
  $region12: #{tpu_custom_call.1} parent=0 // pred_region
    _
  $region13: #{tpu_custom_call.1} parent=0 // pred_fallthru
    _
  // Predicated region
  $region14: #{tpu_custom_call.1} parent=0 // pred_check
    _
  $region15: #{tpu_custom_call.1} parent=0 // pred_check_branch
    %21 = sbr.rel (0) target = $region17
  $region16: #{tpu_custom_call.1} parent=0 // pred_region
    _
  $region17: #{tpu_custom_call.1} parent=0 // pred_fallthru
    _
  // Predicated region
  $region18: #{tpu_custom_call.1} parent=0 // pred_check
    _
  $region19: #{tpu_custom_call.1} parent=0 // pred_check_branch
    %23 = sbr.rel (0) target = $region21
  $region20: #{tpu_custom_call.1} parent=0 // pred_region
    _
  $region21: #{tpu_custom_call.1} parent=0 // pred_fallthru
    _
  // Predicated region
  $region22: #{tpu_custom_call.1} parent=0 // pred_check
    _
  $region23: #{tpu_custom_call.1} parent=0 // pred_check_branch
    %25 = sbr.rel (0) target = $region25
  $region24: #{tpu_custom_call.1} parent=0 // pred_region
    _
  $region25: #{tpu_custom_call.1} parent=0 // pred_fallthru
    _
  // Predicated region
  $region26: #{tpu_custom_call.1} parent=0 // pred_check
    _
  $region27: #{tpu_custom_call.1} parent=0 // pred_check_branch
    %27 = sbr.rel (0) target = $region29
  $region28: #{tpu_custom_call.1} parent=0 // pred_region
    _
  $region29: #{tpu_custom_call.1} parent=0 // pred_fallthru
    _
  // Predicated region
  $region30: #{tpu_custom_call.1} parent=0 // pred_check
    _
  $region31: #{tpu_custom_call.1} parent=0 // pred_check_branch
    %29 = sbr.rel (0) target = $region33
  $region32: #{tpu_custom_call.1} parent=0 // pred_region
    _
  $region33: #{tpu_custom_call.1} parent=0 // pred_fallthru
    _
  // Predicated region
  $region34: #{tpu_custom_call.1} parent=0 // pred_check
    _
  $region35: #{tpu_custom_call.1} parent=0 // pred_check_branch
    %31 = sbr.rel (0) target = $region37
  $region36: #{tpu_custom_call.1} parent=0 // pred_region
    _
  $region37: #{tpu_custom_call.1} parent=0 // pred_fallthru
    _
  %v33 = vld [vmem:[%s0] sm:$0xff]
  %v34 = vld [vmem:[%s0 + $0x8] sm:$0xff]
  %v35 = vld [vmem:[%s0 + $0x10] sm:$0xff]
  %v36 = vld [vmem:[%s0 + $0x18] sm:$0xff]
  %v37 = vpack.c.bf16 %v34, %v33
  %v38 = vpack.c.bf16 %v36, %v35
  %v39 = vld [vmem:[%s1] sm:$0xff]
  %v40 = vld [vmem:[%s1 + $0x8] sm:$0xff]
  %v41 = vld [vmem:[%s2] sm:$0x3]
  %v43 = vlaneseq
  %v44 = vshrl.u32 %v43, 7
  %v45 = vsub.s32 0, %v44
  %v46 = vrot.slane %v41, %v45
  %v47 = vlaneseq
  %v48 = vshrl.u32 %v47, 7
  %v49 = vsub.s32 1, %v48
  %v50 = vrot.slane %v41, %v49
  %v55 = vunpack.c.l.b16 %v39
  %v56 = vunpack.c.h.b16 %v39
  %v57 = vunpack.c.l.b16 %v40
  %v58 = vunpack.c.h.b16 %v40
  %v59 = vpack.c.b16 %v57, %v55
  %v60 = vpack.c.b16 %v58, %v56
  %vm63 = vcmask 130048
  %v65 = vsel %vm63, %v37, 0
  %v68 = vsel %vm63, %v38, 0
  %70 = vmatprep.subr.bf16.mxu0 0
  %71 = vmatpush1.bf16.msra.mxu0 0
  %72 = vmatprep.subr.bf16.mxu0 0
  %73 = vmatpush1.bf16.msra.mxu0 0
  %74 = vmatprep.subr.bf16.mxu0 0
  %75 = vmatpush1.bf16.msra.mxu0 0
  %76 = vmatprep.subr.bf16.mxu0 0
  %77 = vmatpush1.bf16.msra.mxu0 0
  %78 = vmatprep.subr.bf16.mxu0 0
  %79 = vmatpush1.bf16.msra.mxu0 0
  %80 = vmatprep.subr.bf16.mxu0 0
  %81 = vmatpush1.bf16.msra.mxu0 0
  %82 = vmatprep.subr.bf16.mxu0 0
  %83 = vmatpush1.bf16.msra.mxu0 0
  %84 = vmatprep.subr.bf16.mxu0 %v60
  %85 = vmatpush1.bf16.msra.mxu0 %v59
  %86 = vmatprep.subr.bf16.mxu0 0
  %87 = vmatpush2.bf16.msra.mxu0 0
  %88 = vmatprep.subr.bf16.mxu0 0
  %89 = vmatpush2.bf16.msra.mxu0 0
  %90 = vmatprep.subr.bf16.mxu0 0
  %91 = vmatpush2.bf16.msra.mxu0 0
  %92 = vmatprep.subr.bf16.mxu0 0
  %93 = vmatpush2.bf16.msra.mxu0 0
  %94 = vmatprep.subr.bf16.mxu0 0
  %95 = vmatpush2.bf16.msra.mxu0 0
  %96 = vmatprep.subr.bf16.mxu0 0
  %97 = vmatpush2.bf16.msra.mxu0 0
  %98 = vmatprep.subr.bf16.mxu0 0
  %99 = vmatpush2.bf16.msra.mxu0 0
  %100 = vmatprep.subr.bf16.mxu0 0
  %101 = vmatpush2.bf16.msra.mxu0 0
  %102 = vmatprep.mubr.bf16.mxu0 0
  %103 = vmatmul.mubr.bf16.gmra.mxu0 %v65
  %v104 = vpop.f32.mrf.mxu0
  %v105 = vadd.f32 %v46, %v104
  %v106 = vpop.f32.mrf.mxu0
  %v107 = vadd.f32 %v50, %v106
  %v108 = vpop.f32.mrf.mxu0
  %v109 = vadd.f32 %v46, %v108
  %v110 = vpop.f32.mrf.mxu0
  %v111 = vadd.f32 %v50, %v110
  %112 = vmatprep.mubr.bf16.mxu0 0
  %113 = vmatmul.mubr.bf16.gmra.mxu0 %v68
  %v114 = vpop.f32.mrf.mxu0
  %v115 = vadd.f32 %v46, %v114
  %v116 = vpop.f32.mrf.mxu0
  %v117 = vadd.f32 %v50, %v116
  %v118 = vpop.f32.mrf.mxu0
  %v119 = vadd.f32 %v46, %v118
  %v120 = vpop.f32.mrf.mxu0
  %v121 = vadd.f32 %v50, %v120
  %122 = vdwg.mxu0
  %v123 = vmax.f32 %v105, 0.0
  %v124 = vmax.f32 %v107, 0.0
  %v125 = vmax.f32 %v109, 0.0
  %v126 = vmax.f32 %v111, 0.0
  %v127 = vmax.f32 %v115, 0.0
  %v128 = vmax.f32 %v117, 0.0
  %v129 = vmax.f32 %v119, 0.0
  %v130 = vmax.f32 %v121, 0.0
  %v131 = vpack.c.bf16 %v125, %v123
  %v132 = vpack.c.bf16 %v126, %v124
  %v133 = vpack.c.bf16 %v129, %v127
  %v134 = vpack.c.bf16 %v130, %v128
  %v135 = vld [vmem:[%s3] sm:$0xf]
  %v136 = vld [vmem:[%s3 + $0x4] sm:$0xf]
  %v137 = vld [vmem:[%s3 + $0x8] sm:$0xf]
  %v138 = vld [vmem:[%s3 + $0xc] sm:$0xf]
  %v139 = vld [vmem:[%s3 + $0x10] sm:$0xf]
  %v140 = vld [vmem:[%s3 + $0x14] sm:$0xf]
  %v141 = vld [vmem:[%s3 + $0x18] sm:$0xf]
  %v142 = vld [vmem:[%s3 + $0x1c] sm:$0xf]
  %v143 = vld [vmem:[%s3 + $0x20] sm:$0xf]
  %v144 = vld [vmem:[%s3 + $0x24] sm:$0xf]
  %v145 = vld [vmem:[%s3 + $0x28] sm:$0xf]
  %v146 = vld [vmem:[%s3 + $0x2c] sm:$0xf]
  %v147 = vld [vmem:[%s3 + $0x30] sm:$0xf]
  %v148 = vld [vmem:[%s3 + $0x34] sm:$0xf]
  %v149 = vld [vmem:[%s3 + $0x38] sm:$0xf]
  %v150 = vld [vmem:[%s3 + $0x3c] sm:$0xf]
  %v151 = vld [vmem:[%s3 + $0x40] sm:$0xf]
  %v152 = vld [vmem:[%s3 + $0x44] sm:$0xf]
  %v153 = vld [vmem:[%s3 + $0x48] sm:$0xf]
  %v154 = vld [vmem:[%s3 + $0x4c] sm:$0xf]
  %v155 = vld [vmem:[%s3 + $0x50] sm:$0xf]
  %v156 = vld [vmem:[%s3 + $0x54] sm:$0xf]
  %v157 = vld [vmem:[%s3 + $0x58] sm:$0xf]
  %v158 = vld [vmem:[%s3 + $0x5c] sm:$0xf]
  %v159 = vld [vmem:[%s3 + $0x60] sm:$0xf]
  %v160 = vld [vmem:[%s3 + $0x64] sm:$0xf]
  %v161 = vld [vmem:[%s3 + $0x68] sm:$0xf]
  %v162 = vld [vmem:[%s3 + $0x6c] sm:$0xf]
  %v163 = vld [vmem:[%s3 + $0x70] sm:$0xf]
  %v164 = vld [vmem:[%s3 + $0x74] sm:$0xf]
  %v165 = vld [vmem:[%s3 + $0x78] sm:$0xf]
  %v166 = vld [vmem:[%s3 + $0x7c] sm:$0xf]
  %v167 = vld [vmem:[%s4] sm:$0x1]
  %v169 = vlaneseq
  %v170 = vshrl.u32 %v169, 7
  %v171 = vsub.s32 0, %v170
  %v172 = vrot.slane %v167, %v171
  %v206 = vunpack.c.l.b16 %v135
  %v207 = vunpack.c.l.b16 %v136
  %v208 = vunpack.c.l.b16 %v137
  %v209 = vunpack.c.l.b16 %v138
  %v210 = vunpack.c.l.b16 %v139
  %v211 = vunpack.c.l.b16 %v140
  %v212 = vunpack.c.l.b16 %v141
  %v213 = vunpack.c.l.b16 %v142
  %v214 = vunpack.c.l.b16 %v143
  %v215 = vunpack.c.l.b16 %v144
  %v216 = vunpack.c.l.b16 %v145
  %v217 = vunpack.c.l.b16 %v146
  %v218 = vunpack.c.l.b16 %v147
  %v219 = vunpack.c.l.b16 %v148
  %v220 = vunpack.c.l.b16 %v149
  %v221 = vunpack.c.l.b16 %v150
  %v222 = vunpack.c.l.b16 %v151
  %v223 = vunpack.c.l.b16 %v152
  %v224 = vunpack.c.l.b16 %v153
  %v225 = vunpack.c.l.b16 %v154
  %v226 = vunpack.c.l.b16 %v155
  %v227 = vunpack.c.l.b16 %v156
  %v228 = vunpack.c.l.b16 %v157
  %v229 = vunpack.c.l.b16 %v158
  %v230 = vunpack.c.l.b16 %v159
  %v231 = vunpack.c.l.b16 %v160
  %v232 = vunpack.c.l.b16 %v161
  %v233 = vunpack.c.l.b16 %v162
  %v234 = vunpack.c.l.b16 %v163
  %v235 = vunpack.c.l.b16 %v164
  %v236 = vunpack.c.l.b16 %v165
  %v237 = vunpack.c.l.b16 %v166
  %v238 = vpack.c.b16 %v207, %v206
  %v239 = vpack.c.b16 %v209, %v208
  %v240 = vpack.c.b16 %v211, %v210
  %v241 = vpack.c.b16 %v213, %v212
  %v242 = vpack.c.b16 %v215, %v214
  %v243 = vpack.c.b16 %v217, %v216
  %v244 = vpack.c.b16 %v219, %v218
  %v245 = vpack.c.b16 %v221, %v220
  %v246 = vpack.c.b16 %v223, %v222
  %v247 = vpack.c.b16 %v225, %v224
  %v248 = vpack.c.b16 %v227, %v226
  %v249 = vpack.c.b16 %v229, %v228
  %v250 = vpack.c.b16 %v231, %v230
  %v251 = vpack.c.b16 %v233, %v232
  %v252 = vpack.c.b16 %v235, %v234
  %v253 = vpack.c.b16 %v237, %v236
  %270 = vmatprep.subr.bf16.mxu0 0
  %271 = vmatpush1.bf16.msra.mxu0 %v245
  %272 = vmatprep.subr.bf16.mxu0 0
  %273 = vmatpush1.bf16.msra.mxu0 %v244
  %274 = vmatprep.subr.bf16.mxu0 0
  %275 = vmatpush1.bf16.msra.mxu0 %v243
  %276 = vmatprep.subr.bf16.mxu0 0
  %277 = vmatpush1.bf16.msra.mxu0 %v242
  %278 = vmatprep.subr.bf16.mxu0 0
  %279 = vmatpush1.bf16.msra.mxu0 %v241
  %280 = vmatprep.subr.bf16.mxu0 0
  %281 = vmatpush1.bf16.msra.mxu0 %v240
  %282 = vmatprep.subr.bf16.mxu0 0
  %283 = vmatpush1.bf16.msra.mxu0 %v239
  %284 = vmatprep.subr.bf16.mxu0 0
  %285 = vmatpush1.bf16.msra.mxu0 %v238
  %286 = vmatprep.subr.bf16.mxu0 0
  %287 = vmatpush2.bf16.msra.mxu0 %v253
  %288 = vmatprep.subr.bf16.mxu0 0
  %289 = vmatpush2.bf16.msra.mxu0 %v252
  %290 = vmatprep.subr.bf16.mxu0 0
  %291 = vmatpush2.bf16.msra.mxu0 %v251
  %292 = vmatprep.subr.bf16.mxu0 0
  %293 = vmatpush2.bf16.msra.mxu0 %v250
  %294 = vmatprep.subr.bf16.mxu0 0
  %295 = vmatpush2.bf16.msra.mxu0 %v249
  %296 = vmatprep.subr.bf16.mxu0 0
  %297 = vmatpush2.bf16.msra.mxu0 %v248
  %298 = vmatprep.subr.bf16.mxu0 0
  %299 = vmatpush2.bf16.msra.mxu0 %v247
  %300 = vmatprep.subr.bf16.mxu0 0
  %301 = vmatpush2.bf16.msra.mxu0 %v246
  %302 = vmatprep.mubr.bf16.mxu0 %v132
  %303 = vmatmul.mubr.bf16.gmra.mxu0 %v131
  %v304 = vpop.f32.mrf.mxu0
  %v305 = vadd.f32 %v172, %v304
  %v306 = vpop.f32.mrf.mxu0
  %v307 = vpop.f32.mrf.mxu0
  %v308 = vadd.f32 %v172, %v307
  %v309 = vpop.f32.mrf.mxu0
  %310 = vmatprep.mubr.bf16.mxu0 %v134
  %311 = vmatmul.mubr.bf16.gmra.mxu0 %v133
  %v312 = vpop.f32.mrf.mxu0
  %v313 = vadd.f32 %v172, %v312
  %v314 = vpop.f32.mrf.mxu0
  %v315 = vpop.f32.mrf.mxu0
  %v316 = vadd.f32 %v172, %v315
  %v317 = vpop.f32.mrf.mxu0
  %318 = vdwg.mxu0
  %v319 = vmax.f32 %v305, 0.0
  %v320 = vmax.f32 %v308, 0.0
  %v321 = vmax.f32 %v313, 0.0
  %v322 = vmax.f32 %v316, 0.0
  %v323 = vpack.c.bf16 %v320, %v319
  %v324 = vpack.c.bf16 %v322, %v321
  %v325 = vld [vmem:[%s5] sm:$0xf]
  %v326 = vld [vmem:[%s5 + $0x4] sm:$0xf]
  %v327 = vld [vmem:[%s5 + $0x8] sm:$0xf]
  %v328 = vld [vmem:[%s5 + $0xc] sm:$0xf]
  %v329 = vld [vmem:[%s5 + $0x10] sm:$0xf]
  %v330 = vld [vmem:[%s5 + $0x14] sm:$0xf]
  %v331 = vld [vmem:[%s5 + $0x18] sm:$0xf]
  %v332 = vld [vmem:[%s5 + $0x1c] sm:$0xf]
  %v333 = vld [vmem:[%s5 + $0x20] sm:$0xf]
  %v334 = vld [vmem:[%s5 + $0x24] sm:$0xf]
  %v335 = vld [vmem:[%s5 + $0x28] sm:$0xf]
  %v336 = vld [vmem:[%s5 + $0x2c] sm:$0xf]
  %v337 = vld [vmem:[%s5 + $0x30] sm:$0xf]
  %v338 = vld [vmem:[%s5 + $0x34] sm:$0xf]
  %v339 = vld [vmem:[%s5 + $0x38] sm:$0xf]
  %v340 = vld [vmem:[%s5 + $0x3c] sm:$0xf]
  %v341 = vld [vmem:[%s6] sm:$0x1]
  %v343 = vlaneseq
  %v344 = vshrl.u32 %v343, 7
  %v345 = vsub.s32 0, %v344
  %v346 = vrot.slane %v341, %v345
  %v364 = vunpack.c.l.b16 %v325
  %v365 = vunpack.c.l.b16 %v326
  %v366 = vunpack.c.l.b16 %v327
  %v367 = vunpack.c.l.b16 %v328
  %v368 = vunpack.c.l.b16 %v329
  %v369 = vunpack.c.l.b16 %v330
  %v370 = vunpack.c.l.b16 %v331
  %v371 = vunpack.c.l.b16 %v332
  %v372 = vunpack.c.l.b16 %v333
  %v373 = vunpack.c.l.b16 %v334
  %v374 = vunpack.c.l.b16 %v335
  %v375 = vunpack.c.l.b16 %v336
  %v376 = vunpack.c.l.b16 %v337
  %v377 = vunpack.c.l.b16 %v338
  %v378 = vunpack.c.l.b16 %v339
  %v379 = vunpack.c.l.b16 %v340
  %v380 = vpack.c.b16 %v365, %v364
  %v381 = vpack.c.b16 %v367, %v366
  %v382 = vpack.c.b16 %v369, %v368
  %v383 = vpack.c.b16 %v371, %v370
  %v384 = vpack.c.b16 %v373, %v372
  %v385 = vpack.c.b16 %v375, %v374
  %v386 = vpack.c.b16 %v377, %v376
  %v387 = vpack.c.b16 %v379, %v378
  %396 = vmatprep.subr.bf16.mxu0 0
  %397 = vmatpush1.bf16.msra.mxu0 %v387
  %398 = vmatprep.subr.bf16.mxu0 0
  %399 = vmatpush1.bf16.msra.mxu0 %v386
  %400 = vmatprep.subr.bf16.mxu0 0
  %401 = vmatpush1.bf16.msra.mxu0 %v385
  %402 = vmatprep.subr.bf16.mxu0 0
  %403 = vmatpush1.bf16.msra.mxu0 %v384
  %404 = vmatprep.subr.bf16.mxu0 0
  %405 = vmatpush1.bf16.msra.mxu0 %v383
  %406 = vmatprep.subr.bf16.mxu0 0
  %407 = vmatpush1.bf16.msra.mxu0 %v382
  %408 = vmatprep.subr.bf16.mxu0 0
  %409 = vmatpush1.bf16.msra.mxu0 %v381
  %410 = vmatprep.subr.bf16.mxu0 0
  %411 = vmatpush1.bf16.msra.mxu0 %v380
  %412 = vmatprep.subr.bf16.mxu0 0
  %413 = vmatpush2.bf16.msra.mxu0 0
  %414 = vmatprep.subr.bf16.mxu0 0
  %415 = vmatpush2.bf16.msra.mxu0 0
  %416 = vmatprep.subr.bf16.mxu0 0
  %417 = vmatpush2.bf16.msra.mxu0 0
  %418 = vmatprep.subr.bf16.mxu0 0
  %419 = vmatpush2.bf16.msra.mxu0 0
  %420 = vmatprep.subr.bf16.mxu0 0
  %421 = vmatpush2.bf16.msra.mxu0 0
  %422 = vmatprep.subr.bf16.mxu0 0
  %423 = vmatpush2.bf16.msra.mxu0 0
  %424 = vmatprep.subr.bf16.mxu0 0
  %425 = vmatpush2.bf16.msra.mxu0 0
  %426 = vmatprep.subr.bf16.mxu0 0
  %427 = vmatpush2.bf16.msra.mxu0 0
  %428 = vmatprep.mubr.bf16.mxu0 0
  %429 = vmatmul.mubr.bf16.gmra.mxu0 %v323
  %v430 = vpop.f32.mrf.mxu0
  %v431 = vadd.f32 %v346, %v430
  %v432 = vpop.f32.mrf.mxu0
  %v433 = vpop.f32.mrf.mxu0
  %v434 = vadd.f32 %v346, %v433
  %v435 = vpop.f32.mrf.mxu0
  %436 = vmatprep.mubr.bf16.mxu0 0
  %437 = vmatmul.mubr.bf16.gmra.mxu0 %v324
  %v438 = vpop.f32.mrf.mxu0
  %v439 = vadd.f32 %v346, %v438
  %v440 = vpop.f32.mrf.mxu0
  %v441 = vpop.f32.mrf.mxu0
  %v442 = vadd.f32 %v346, %v441
  %v443 = vpop.f32.mrf.mxu0
  %444 = vdwg.mxu0
  %v445 = vmax.f32 %v431, 0.0
  %v446 = vmax.f32 %v434, 0.0
  %v447 = vmax.f32 %v439, 0.0
  %v448 = vmax.f32 %v442, 0.0
  %v449 = vpack.c.bf16 %v446, %v445
  %v450 = vpack.c.bf16 %v448, %v447
  %v451 = vld [vmem:[%s7] sm:$0xf]
  %v452 = vld [vmem:[%s7 + $0x4] sm:$0xf]
  %v453 = vld [vmem:[%s7 + $0x8] sm:$0xf]
  %v454 = vld [vmem:[%s7 + $0xc] sm:$0xf]
  %v455 = vld [vmem:[%s7 + $0x10] sm:$0xf]
  %v456 = vld [vmem:[%s7 + $0x14] sm:$0xf]
  %v457 = vld [vmem:[%s7 + $0x18] sm:$0xf]
  %v458 = vld [vmem:[%s7 + $0x1c] sm:$0xf]
  %v459 = vld [vmem:[%s8] sm:$0x1]
  %v461 = vlaneseq
  %v462 = vshrl.u32 %v461, 7
  %v463 = vsub.s32 0, %v462
  %v464 = vrot.slane %v459, %v463
  %v474 = vunpack.c.l.b16 %v451
  %v475 = vunpack.c.l.b16 %v452
  %v476 = vunpack.c.l.b16 %v453
  %v477 = vunpack.c.l.b16 %v454
  %v478 = vunpack.c.l.b16 %v455
  %v479 = vunpack.c.l.b16 %v456
  %v480 = vunpack.c.l.b16 %v457
  %v481 = vunpack.c.l.b16 %v458
  %v482 = vpack.c.b16 %v475, %v474
  %v483 = vpack.c.b16 %v477, %v476
  %v484 = vpack.c.b16 %v479, %v478
  %v485 = vpack.c.b16 %v481, %v480
  %vm490 = vcmask 523264
  %v492 = vsel %vm490, %v449, 0
  %v495 = vsel %vm490, %v450, 0
  %497 = vmatprep.subr.bf16.mxu0 0
  %498 = vmatpush1.bf16.msra.mxu0 0
  %499 = vmatprep.subr.bf16.mxu0 0
  %500 = vmatpush1.bf16.msra.mxu0 0
  %501 = vmatprep.subr.bf16.mxu0 0
  %502 = vmatpush1.bf16.msra.mxu0 0
  %503 = vmatprep.subr.bf16.mxu0 0
  %504 = vmatpush1.bf16.msra.mxu0 0
  %505 = vmatprep.subr.bf16.mxu0 0
  %506 = vmatpush1.bf16.msra.mxu0 %v485
  %507 = vmatprep.subr.bf16.mxu0 0
  %508 = vmatpush1.bf16.msra.mxu0 %v484
  %509 = vmatprep.subr.bf16.mxu0 0
  %510 = vmatpush1.bf16.msra.mxu0 %v483
  %511 = vmatprep.subr.bf16.mxu0 0
  %512 = vmatpush1.bf16.msra.mxu0 %v482
  %513 = vmatprep.subr.bf16.mxu0 0
  %514 = vmatpush2.bf16.msra.mxu0 0
  %515 = vmatprep.subr.bf16.mxu0 0
  %516 = vmatpush2.bf16.msra.mxu0 0
  %517 = vmatprep.subr.bf16.mxu0 0
  %518 = vmatpush2.bf16.msra.mxu0 0
  %519 = vmatprep.subr.bf16.mxu0 0
  %520 = vmatpush2.bf16.msra.mxu0 0
  %521 = vmatprep.subr.bf16.mxu0 0
  %522 = vmatpush2.bf16.msra.mxu0 0
  %523 = vmatprep.subr.bf16.mxu0 0
  %524 = vmatpush2.bf16.msra.mxu0 0
  %525 = vmatprep.subr.bf16.mxu0 0
  %526 = vmatpush2.bf16.msra.mxu0 0
  %527 = vmatprep.subr.bf16.mxu0 0
  %528 = vmatpush2.bf16.msra.mxu0 0
  %529 = vmatprep.mubr.bf16.mxu0 0
  %530 = vmatmul.mubr.bf16.gmra.mxu0 %v492
  %v531 = vpop.f32.mrf.mxu0
  %v532 = vadd.f32 %v464, %v531
  %v533 = vpop.f32.mrf.mxu0
  %v534 = vpop.f32.mrf.mxu0
  %v535 = vadd.f32 %v464, %v534
  %v536 = vpop.f32.mrf.mxu0
  %537 = vmatprep.mubr.bf16.mxu0 0
  %538 = vmatmul.mubr.bf16.gmra.mxu0 %v495
  %v539 = vpop.f32.mrf.mxu0
  %v540 = vadd.f32 %v464, %v539
  %v541 = vpop.f32.mrf.mxu0
  %v542 = vpop.f32.mrf.mxu0
  %v543 = vadd.f32 %v464, %v542
  %v544 = vpop.f32.mrf.mxu0
  %545 = vdwg.mxu0
  %vm546 = vcmask 31744
  %547 = vst.msk [vmem:[%s9] sm:$0xff] %vm546, %v532
  %548 = vst.msk [vmem:[%s9 + $0x8] sm:$0xff] %vm546, %v535
  %549 = vst.msk [vmem:[%s9 + $0x10] sm:$0xff] %vm546, %v540
  %550 = vst.msk [vmem:[%s9 + $0x18] sm:$0xff] %vm546, %v543
  // Predicated region
  $region38: #{tpu_custom_call.1} parent=0 // pred_check
    _
  $region39: #{tpu_custom_call.1} parent=0 // pred_check_branch
    %552 = sbr.rel (0) target = $region41
  $region40: #{tpu_custom_call.1} parent=0 // pred_region
    _
  $region41: #{tpu_custom_call.1} parent=0 // pred_fallthru
    _
  // Predicated region
  $region42: #{tpu_custom_call.1} parent=0 // pred_check
    _
  $region43: #{tpu_custom_call.1} parent=0 // pred_check_branch
    %554 = sbr.rel (0) target = $region45
  $region44: #{tpu_custom_call.1} parent=0 // pred_region
    _
  $region45: #{tpu_custom_call.1} parent=0 // pred_fallthru
    _

</llo_original>
